<compile_context>
chip_gen: v6e
topology: v6e:2x2x1
jax: 0.10.0
libtpu: 0.0.40
codegen_flags: <defaults>
</compile_context>

<pallas_src>
import numpy as np
import jax
import jax.numpy as jnp
from jax.experimental import pallas as pl
from jax.experimental.pallas import tpu as pltpu

_LOG_1E3 = float(np.log(1e-3))   # fold the 0.001 reparam scale into the exp
_LANE = 128


# ----------------------------------------------------------------------------
# Fused Pallas kernel: whole Regressor forward (merged-M siamese branches)
# ----------------------------------------------------------------------------
def _regressor_kernel(x1_ref, x2_ref, e1_ref, e2_ref,
                      w1_ref, ws_ref, bs_ref,
                      o_ref, xs_ref):
    """x1/x2: [tb, 16]   e1/e2: [tb, 128] (zero-padded noise)
       w1: [16, 128] bf16   ws: [7, 128, 128] bf16   bs: [7, 128] f32
       o:  [tb, 128]        xs: VMEM scratch [2*tb, 16] f32"""
    tb = x1_ref.shape[0]

    def bias(i):                                   # [1, 128] f32 bias row
        return bs_ref[pl.ds(i, 1), :]

    def dense(a, w, b, leaky=True):
        y = jnp.dot(a.astype(jnp.bfloat16), w,
                    preferred_element_type=jnp.float32) + b
        if leaky:                                  # LeakyReLU(0.01), f32
            y = jnp.maximum(y, 0.01 * y)
        return y

    # Merge the two siamese branches along the GEMM M axis: one dot per layer.
    xs_ref[pl.ds(0, tb), :] = x1_ref[...]
    xs_ref[pl.ds(tb, tb), :] = x2_ref[...]
    x_all = xs_ref[...]                                           # [2*tb, 16]

    h = dense(x_all, w1_ref[...], bias(0))                        # conv1 (folded)
    h = dense(h, ws_ref[0], bias(1))                              # avgpool + conv2 (folded)
    h = dense(h, ws_ref[1], bias(2))                              # fc4
    h = dense(h, ws_ref[2], bias(3))                              # fc5  -> mu (lanes 84.. are 0)
    logvar = dense(h, ws_ref[3], bias(4), leaky=False)            # EncBlock linear

    # TODO(synk): noise could be generated in-kernel with pltpu.prng_* to drop the
    # eps HBM stream entirely; kept as an explicit input to match external RNG.
    scale = jnp.exp(0.5 * logvar + _LOG_1E3)                      # f32 EUP
    f1 = e1_ref[...] * scale[:tb] + h[:tb]                        # reparam, branch 1
    f2 = e2_ref[...] * scale[tb:] + h[tb:]                        # reparam, branch 2

    # head: fc1 on concat([f1, f2], dim=1) as split-weight GEMMs, then ReLU, fc2
    z = (jnp.dot(f1.astype(jnp.bfloat16), ws_ref[4], preferred_element_type=jnp.float32)
         + jnp.dot(f2.astype(jnp.bfloat16), ws_ref[5], preferred_element_type=jnp.float32)
         + bias(5))
    z = jnp.maximum(z, 0.0)
    o_ref[...] = (jnp.dot(z.astype(jnp.bfloat16), ws_ref[6],
                          preferred_element_type=jnp.float32) + bias(6))


# ----------------------------------------------------------------------------
# Init-time weight folding (conv / pool -> dense matrices, lane-dense padding)
# ----------------------------------------------------------------------------
def conv3x3_same_as_matrix(w, b, H, W):
    """Conv2d(k=3, s=1, padding='same'), PyTorch weight [Co,Ci,3,3], acting on
       NCHW-flattened activations.  Returns (M: [Ci*H*W, Co*H*W], bias [Co*H*W])."""
    w = np.asarray(w, dtype=np.float32)
    b = np.asarray(b, dtype=np.float32)
    Co, Ci, KH, KW = w.shape
    M = np.zeros((Ci * H * W, Co * H * W), np.float32)
    for co in range(Co):
        for ci in range(Ci):
            for dh in range(KH):
                for dw in range(KW):
                    for ho in range(H):
                        for wo in range(W):
                            hi, wi = ho + dh - 1, wo + dw - 1
                            if 0 <= hi < H and 0 <= wi < W:
                                M[ci * H * W + hi * W + wi,
                                  co * H * W + ho * W + wo] += w[co, ci, dh, dw]
    return M, np.repeat(b, H * W)


def avgpool2x2_as_matrix(C, H, W):
    """AvgPool2d(2) on NCHW-flattened activations: [C*H*W, C*(H//2)*(W//2)]."""
    Ho, Wo = H // 2, W // 2
    P = np.zeros((C * H * W, C * Ho * Wo), np.float32)
    for c in range(C):
        for h in range(H):
            for w in range(W):
                P[c * H * W + h * W + w,
                  c * Ho * Wo + (h // 2) * Wo + (w // 2)] = 0.25
    return P


def _pad2(a, rows, cols):
    a = np.asarray(a, np.float32)
    out = np.zeros((rows, cols), np.float32)
    out[: a.shape[0], : a.shape[1]] = a
    return out


def fold_params(raw):
    """One-time transform of PyTorch-layout params into pre-transposed, pre-folded,
       zero-padded (lane-dense, N=128) bf16 weight slabs + one f32 bias slab."""
    w1m, b1v = conv3x3_same_as_matrix(raw["conv1_w"], raw["conv1_b"], 4, 4)   # [16,128]
    w2m, b2v = conv3x3_same_as_matrix(raw["conv2_w"], raw["conv2_b"], 2, 2)   # [32,64]
    pool = avgpool2x2_as_matrix(8, 4, 4)                                      # [128,32]
    fc1_t = np.asarray(raw["fc1_w"], np.float32).T                            # [168,42]

    wmats = [
        _pad2(pool @ w2m, _LANE, _LANE),                                 # 0: pool∘conv2
        _pad2(np.asarray(raw["fc4_w"], np.float32).T, _LANE, _LANE),     # 1: fc4
        _pad2(np.asarray(raw["fc5_w"], np.float32).T, _LANE, _LANE),     # 2: fc5
        _pad2(np.asarray(raw["enc_w"], np.float32).T, _LANE, _LANE),     # 3: enc (logvar)
        _pad2(fc1_t[:84], _LANE, _LANE),                                 # 4: fc1, branch-1 half
        _pad2(fc1_t[84:], _LANE, _LANE),                                 # 5: fc1, branch-2 half
        _pad2(np.asarray(raw["fc2_w"], np.float32).T, _LANE, _LANE),     # 6: fc2
    ]
    biases = [
        b1v,                                       # conv1 (len 128)
        b2v,                                       # conv2 (len 64, zero-padded)
        np.asarray(raw["fc4_b"], np.float32),
        np.asarray(raw["fc5_b"], np.float32),
        np.asarray(raw["enc_b"], np.float32),
        np.asarray(raw["fc1_b"], np.float32),
        np.asarray(raw["fc2_b"], np.float32),
    ]
    bslab = np.stack([_pad2(b[None, :], 1, _LANE)[0] for b in biases])   # [7,128]

    return {
        "w1": jnp.asarray(w1m, jnp.bfloat16),                  # [16,128]
        "wslab": jnp.asarray(np.stack(wmats), jnp.bfloat16),   # [7,128,128]
        "bslab": jnp.asarray(bslab, jnp.float32),              # [7,128]
    }


def init_params(key):
    """Deterministic synthetic parameters (all Linear biases zeroed, matching
       Regressor.__init__; conv biases stay random)."""
    ks = jax.random.split(key, 8)
    s = 0.1
    return {
        "conv1_w": s * jax.random.normal(ks[0], (8, 1, 3, 3), jnp.float32),
        "conv1_b": s * jax.random.normal(ks[1], (8,), jnp.float32),
        "conv2_w": s * jax.random.normal(ks[2], (16, 8, 3, 3), jnp.float32),
        "conv2_b": s * jax.random.normal(ks[3], (16,), jnp.float32),
        "fc4_w": s * jax.random.normal(ks[4], (128, 64), jnp.float32),
        "fc4_b": jnp.zeros((128,), jnp.float32),
        "fc5_w": s * jax.random.normal(ks[5], (84, 128), jnp.float32),
        "fc5_b": jnp.zeros((84,), jnp.float32),
        "enc_w": s * jax.random.normal(ks[6], (84, 84), jnp.float32),
        "enc_b": jnp.zeros((84,), jnp.float32),
        "fc1_w": s * jax.random.normal(ks[7], (42, 168), jnp.float32),
        "fc1_b": jnp.zeros((42,), jnp.float32),
        "fc2_w": s * jax.random.normal(jax.random.fold_in(key, 99), (4, 42), jnp.float32),
        "fc2_b": jnp.zeros((4,), jnp.float32),
    }


# ----------------------------------------------------------------------------
# Forward wrapper: one fused pallas_call for the whole model
# ----------------------------------------------------------------------------
def regressor_forward(x1, x2, eps1, eps2, folded, *, max_tile=512):
    B = x1.shape[0]
    x1 = x1.reshape(B, -1).astype(jnp.float32)            # [B,16]
    x2 = x2.reshape(B, -1).astype(jnp.float32)

    # Batch tiling: round B up to a multiple of 8 (sublane alignment so the in-kernel
    # branch merge/split is tile-aligned), tile at <=512 rows, pad the ragged tail.
    b8 = ((B + 7) // 8) * 8
    tb = min(max_tile, b8)
    steps = -(-b8 // tb)
    b_pad = steps * tb

    def pad(a, cols_to=None):
        pr = b_pad - a.shape[0]
        pc = 0 if cols_to is None else cols_to - a.shape[1]
        return jnp.pad(a, ((0, pr), (0, pc))) if (pr or pc) else a

    x1p, x2p = pad(x1), pad(x2)
    e1p = pad(eps1.astype(jnp.float32), cols_to=_LANE)     # lane-dense noise
    e2p = pad(eps2.astype(jnp.float32), cols_to=_LANE)

    out = pl.pallas_call(
        _regressor_kernel,
        out_shape=jax.ShapeDtypeStruct((b_pad, _LANE), jnp.float32),
        grid=(steps,),
        in_specs=[
            pl.BlockSpec((tb, 16), lambda i: (i, 0)),                  # x1
            pl.BlockSpec((tb, 16), lambda i: (i, 0)),                  # x2
            pl.BlockSpec((tb, _LANE), lambda i: (i, 0)),               # eps1
            pl.BlockSpec((tb, _LANE), lambda i: (i, 0)),               # eps2
            pl.BlockSpec((16, _LANE), lambda i: (0, 0)),               # w1 (conv1 folded)
            pl.BlockSpec((7, _LANE, _LANE), lambda i: (0, 0, 0)),      # weight slab
            pl.BlockSpec((7, _LANE), lambda i: (0, 0)),                # bias slab
        ],
        out_specs=pl.BlockSpec((tb, _LANE), lambda i: (i, 0)),
        scratch_shapes=[pltpu.VMEM((2 * tb, 16), jnp.float32)],        # branch-merge buffer
        compiler_params=pltpu.CompilerParams(
            dimension_semantics=("parallel",)),                        # megacore-shardable
    )(x1p, x2p, e1p, e2p, folded["w1"], folded["wslab"], folded["bslab"])

    return out[:B, :4]


# ----------------------------------------------------------------------------
# Pure-JAX reference (original op structure, f32 HIGHEST) for correctness check
# ----------------------------------------------------------------------------
def _reference_forward(x1, x2, eps1, eps2, raw):
    hi = jax.lax.Precision.HIGHEST
    mm = lambda a, b: jnp.dot(a, b, precision=hi)
    leaky = lambda v: jnp.where(v >= 0, v, 0.01 * v)

    def branch(x, eps):
        y = jax.lax.conv_general_dilated(
            x, raw["conv1_w"], (1, 1), "SAME",
            dimension_numbers=("NCHW", "OIHW", "NCHW"), precision=hi)
        y = leaky(y + raw["conv1_b"].reshape(1, -1, 1, 1))
        B_, C_, H_, W_ = y.shape
        y = y.reshape(B_, C_, H_ // 2, 2, W_ // 2, 2).mean(axis=(3, 5))     # AvgPool2d(2)
        y = jax.lax.conv_general_dilated(
            y, raw["conv2_w"], (1, 1), "SAME",
            dimension_numbers=("NCHW", "OIHW", "NCHW"), precision=hi)
        y = leaky(y + raw["conv2_b"].reshape(1, -1, 1, 1))
        y = y.reshape(y.shape[0], -1)                                       # Flatten (NCHW)
        y = leaky(mm(y, raw["fc4_w"].T) + raw["fc4_b"])
        y = leaky(mm(y, raw["fc5_w"].T) + raw["fc5_b"])
        logvar = mm(y, raw["enc_w"].T) + raw["enc_b"]
        return eps * (jnp.exp(0.5 * logvar) * 0.001) + y

    f1, f2 = branch(x1, eps1), branch(x2, eps2)
    z = mm(jnp.concatenate([f1, f2], axis=1), raw["fc1_w"].T) + raw["fc1_b"]
    z = jnp.maximum(z, 0.0)
    return mm(z, raw["fc2_w"].T) + raw["fc2_b"]


# ----------------------------------------------------------------------------
if __name__ == "__main__":
    key = jax.random.PRNGKey(0)
    k_x1, k_x2, k_e1, k_e2, k_p = jax.random.split(key, 5)

    B = 2
    x1 = jax.random.normal(k_x1, (B, 1, 4, 4), jnp.float32)
    x2 = jax.random.normal(k_x2, (B, 1, 4, 4), jnp.float32)

    # TODO(synk): torch.randn_like's RNG stream is not reproducible in JAX;
    # equivalent Gaussian noise is drawn with jax.random and passed in explicitly.
    eps1 = jax.random.normal(k_e1, (B, 84), jnp.float32)
    eps2 = jax.random.normal(k_e2, (B, 84), jnp.float32)

    raw_params = init_params(k_p)
    folded_params = fold_params(raw_params)       # one-time init-side folding/padding

    fwd = jax.jit(regressor_forward)
    out = jax.block_until_ready(fwd(x1, x2, eps1, eps2, folded_params))

    assert out.shape == (B, 4), out.shape
    assert bool(jnp.all(jnp.isfinite(out)))

    ref = _reference_forward(x1, x2, eps1, eps2, raw_params)
    # bf16 MXU path vs f32-HIGHEST reference -> tolerances sized for bf16 accumulation.
    assert bool(jnp.allclose(out, ref, rtol=5e-2, atol=1e-2)), (np.asarray(out), np.asarray(ref))

    print("KERNEL_OK")
</pallas_src>

<mosaic_0001>
module attributes {stable_mosaic.version = 11 : i64} {
  func.func @_regressor_kernel(%arg0: i32, %arg1: memref<8x16xf32, #tpu.memory_space<vmem>>, %arg2: memref<8x16xf32, #tpu.memory_space<vmem>>, %arg3: memref<8x128xf32, #tpu.memory_space<vmem>>, %arg4: memref<8x128xf32, #tpu.memory_space<vmem>>, %arg5: memref<16x128xbf16, #tpu.memory_space<vmem>>, %arg6: memref<7x128x128xbf16, #tpu.memory_space<vmem>>, %arg7: memref<7x128xf32, #tpu.memory_space<vmem>>, %arg8: memref<8x128xf32, #tpu.memory_space<vmem>>, %arg9: memref<16x16xf32, #tpu.memory_space<vmem>>) attributes {dimension_semantics = [#tpu.dimension_semantics<parallel>], iteration_bounds = array<i64: 1>, scalar_prefetch = 0 : i64, scratch_operands = 1 : i64, tpu.core_type = #tpu.core_type<tc>, window_params = [{transform_indices = @transform_0, window_bounds = array<i64: 8, 16>}, {transform_indices = @transform_1, window_bounds = array<i64: 8, 16>}, {transform_indices = @transform_2, window_bounds = array<i64: 8, 128>}, {transform_indices = @transform_3, window_bounds = array<i64: 8, 128>}, {pipeline_mode = #tpu.pipeline_mode<synchronous>, transform_indices = @transform_4, window_bounds = array<i64: 16, 128>}, {pipeline_mode = #tpu.pipeline_mode<synchronous>, transform_indices = @transform_5, window_bounds = array<i64: 7, 128, 128>}, {pipeline_mode = #tpu.pipeline_mode<synchronous>, transform_indices = @transform_6, window_bounds = array<i64: 7, 128>}, {transform_indices = @transform_7, window_bounds = array<i64: 8, 128>}]} {
    %c0 = arith.constant 0 : index
    %c0_0 = arith.constant 0 : index
    %0 = vector.load %arg1[%c0, %c0_0] : memref<8x16xf32, #tpu.memory_space<vmem>>, vector<8x16xf32>
    %c0_1 = arith.constant 0 : index
    %c0_2 = arith.constant 0 : index
    %1 = vector.load %arg9[%c0_1, %c0_2] : memref<16x16xf32, #tpu.memory_space<vmem>>, vector<8x16xf32>
    tpu.vector_store %arg9[%c0_1, %c0_2], %0 {strides = array<i32>} : memref<16x16xf32, #tpu.memory_space<vmem>>, vector<8x16xf32>,
    %c0_3 = arith.constant 0 : index
    %c0_4 = arith.constant 0 : index
    %2 = vector.load %arg2[%c0_3, %c0_4] : memref<8x16xf32, #tpu.memory_space<vmem>>, vector<8x16xf32>
    %c8 = arith.constant 8 : index
    %c0_5 = arith.constant 0 : index
    %3 = vector.load %arg9[%c8, %c0_5] : memref<16x16xf32, #tpu.memory_space<vmem>>, vector<8x16xf32>
    tpu.vector_store %arg9[%c8, %c0_5], %2 {strides = array<i32>} : memref<16x16xf32, #tpu.memory_space<vmem>>, vector<8x16xf32>,
    %c0_6 = arith.constant 0 : index
    %c0_7 = arith.constant 0 : index
    %4 = vector.load %arg9[%c0_6, %c0_7] : memref<16x16xf32, #tpu.memory_space<vmem>>, vector<16x16xf32>
    %c0_8 = arith.constant 0 : index
    %c0_9 = arith.constant 0 : index
    %5 = vector.load %arg5[%c0_8, %c0_9] : memref<16x128xbf16, #tpu.memory_space<vmem>>, vector<16x128xbf16>
    %c0_10 = arith.constant 0 : index
    %c0_11 = arith.constant 0 : index
    %6 = vector.load %arg7[%c0_10, %c0_11] : memref<7x128xf32, #tpu.memory_space<vmem>>, vector<1x128xf32>
    %7 = arith.truncf %4 : vector<16x16xf32> to vector<16x16xbf16>
    %cst = arith.constant dense<0.000000e+00> : vector<16x128xf32>
    %8 = tpu.matmul %7, %5, %cst {dimension_numbers = #tpu.dot_dimension_numbers<[1], [0], [0], [1], [0, 0, 1, 1], [], []>} : vector<16x16xbf16>, vector<16x128xbf16>, vector<16x128xf32> -> vector<16x128xf32>
    %9 = vector.broadcast %6 : vector<1x128xf32> to vector<16x128xf32>
    %10 = arith.addf %8, %9 : vector<16x128xf32>
    %cst_12 = arith.constant 0.00999999977 : f32
    %11 = vector.broadcast %cst_12 : f32 to vector<16x128xf32>
    %12 = arith.mulf %11, %10 : vector<16x128xf32>
    %13 = arith.maximumf %10, %12 : vector<16x128xf32>
    %c0_13 = arith.constant 0 : index
    %c0_14 = arith.constant 0 : index
    %c0_15 = arith.constant 0 : index
    %14 = vector.load %arg6[%c0_13, %c0_14, %c0_15] : memref<7x128x128xbf16, #tpu.memory_space<vmem>>, vector<1x128x128xbf16>
    %15 = vector.shape_cast %14 : vector<1x128x128xbf16> to vector<128x128xbf16>
    %c1 = arith.constant 1 : index
    %c0_16 = arith.constant 0 : index
    %16 = vector.load %arg7[%c1, %c0_16] : memref<7x128xf32, #tpu.memory_space<vmem>>, vector<1x128xf32>
    %17 = arith.truncf %13 : vector<16x128xf32> to vector<16x128xbf16>
    %cst_17 = arith.constant dense<0.000000e+00> : vector<16x128xf32>
    %18 = tpu.matmul %17, %15, %cst_17 {dimension_numbers = #tpu.dot_dimension_numbers<[1], [0], [0], [1], [0, 0, 1, 1], [], []>} : vector<16x128xbf16>, vector<128x128xbf16>, vector<16x128xf32> -> vector<16x128xf32>
    %19 = vector.broadcast %16 : vector<1x128xf32> to vector<16x128xf32>
    %20 = arith.addf %18, %19 : vector<16x128xf32>
    %cst_18 = arith.constant 0.00999999977 : f32
    %21 = vector.broadcast %cst_18 : f32 to vector<16x128xf32>
    %22 = arith.mulf %21, %20 : vector<16x128xf32>
    %23 = arith.maximumf %20, %22 : vector<16x128xf32>
    %c1_19 = arith.constant 1 : index
    %c0_20 = arith.constant 0 : index
    %c0_21 = arith.constant 0 : index
    %24 = vector.load %arg6[%c1_19, %c0_20, %c0_21] : memref<7x128x128xbf16, #tpu.memory_space<vmem>>, vector<1x128x128xbf16>
    %25 = vector.shape_cast %24 : vector<1x128x128xbf16> to vector<128x128xbf16>
    %c2 = arith.constant 2 : index
    %c0_22 = arith.constant 0 : index
    %26 = vector.load %arg7[%c2, %c0_22] : memref<7x128xf32, #tpu.memory_space<vmem>>, vector<1x128xf32>
    %27 = arith.truncf %23 : vector<16x128xf32> to vector<16x128xbf16>
    %cst_23 = arith.constant dense<0.000000e+00> : vector<16x128xf32>
    %28 = tpu.matmul %27, %25, %cst_23 {dimension_numbers = #tpu.dot_dimension_numbers<[1], [0], [0], [1], [0, 0, 1, 1], [], []>} : vector<16x128xbf16>, vector<128x128xbf16>, vector<16x128xf32> -> vector<16x128xf32>
    %29 = vector.broadcast %26 : vector<1x128xf32> to vector<16x128xf32>
    %30 = arith.addf %28, %29 : vector<16x128xf32>
    %cst_24 = arith.constant 0.00999999977 : f32
    %31 = vector.broadcast %cst_24 : f32 to vector<16x128xf32>
    %32 = arith.mulf %31, %30 : vector<16x128xf32>
    %33 = arith.maximumf %30, %32 : vector<16x128xf32>
    %c2_25 = arith.constant 2 : index
    %c0_26 = arith.constant 0 : index
    %c0_27 = arith.constant 0 : index
    %34 = vector.load %arg6[%c2_25, %c0_26, %c0_27] : memref<7x128x128xbf16, #tpu.memory_space<vmem>>, vector<1x128x128xbf16>
    %35 = vector.shape_cast %34 : vector<1x128x128xbf16> to vector<128x128xbf16>
    %c3 = arith.constant 3 : index
    %c0_28 = arith.constant 0 : index
    %36 = vector.load %arg7[%c3, %c0_28] : memref<7x128xf32, #tpu.memory_space<vmem>>, vector<1x128xf32>
    %37 = arith.truncf %33 : vector<16x128xf32> to vector<16x128xbf16>
    %cst_29 = arith.constant dense<0.000000e+00> : vector<16x128xf32>
    %38 = tpu.matmul %37, %35, %cst_29 {dimension_numbers = #tpu.dot_dimension_numbers<[1], [0], [0], [1], [0, 0, 1, 1], [], []>} : vector<16x128xbf16>, vector<128x128xbf16>, vector<16x128xf32> -> vector<16x128xf32>
    %39 = vector.broadcast %36 : vector<1x128xf32> to vector<16x128xf32>
    %40 = arith.addf %38, %39 : vector<16x128xf32>
    %cst_30 = arith.constant 0.00999999977 : f32
    %41 = vector.broadcast %cst_30 : f32 to vector<16x128xf32>
    %42 = arith.mulf %41, %40 : vector<16x128xf32>
    %43 = arith.maximumf %40, %42 : vector<16x128xf32>
    %c3_31 = arith.constant 3 : index
    %c0_32 = arith.constant 0 : index
    %c0_33 = arith.constant 0 : index
    %44 = vector.load %arg6[%c3_31, %c0_32, %c0_33] : memref<7x128x128xbf16, #tpu.memory_space<vmem>>, vector<1x128x128xbf16>
    %45 = vector.shape_cast %44 : vector<1x128x128xbf16> to vector<128x128xbf16>
    %c4 = arith.constant 4 : index
    %c0_34 = arith.constant 0 : index
    %46 = vector.load %arg7[%c4, %c0_34] : memref<7x128xf32, #tpu.memory_space<vmem>>, vector<1x128xf32>
    %47 = arith.truncf %43 : vector<16x128xf32> to vector<16x128xbf16>
    %cst_35 = arith.constant dense<0.000000e+00> : vector<16x128xf32>
    %48 = tpu.matmul %47, %45, %cst_35 {dimension_numbers = #tpu.dot_dimension_numbers<[1], [0], [0], [1], [0, 0, 1, 1], [], []>} : vector<16x128xbf16>, vector<128x128xbf16>, vector<16x128xf32> -> vector<16x128xf32>
    %49 = vector.broadcast %46 : vector<1x128xf32> to vector<16x128xf32>
    %50 = arith.addf %48, %49 : vector<16x128xf32>
    %cst_36 = arith.constant 5.000000e-01 : f32
    %51 = vector.broadcast %cst_36 : f32 to vector<16x128xf32>
    %52 = arith.mulf %51, %50 : vector<16x128xf32>
    %cst_37 = arith.constant -6.90775537 : f32
    %53 = vector.broadcast %cst_37 : f32 to vector<16x128xf32>
    %54 = arith.addf %52, %53 : vector<16x128xf32>
    %55 = math.exp %54 : vector<16x128xf32>
    %c0_38 = arith.constant 0 : index
    %c0_39 = arith.constant 0 : index
    %56 = vector.load %arg3[%c0_38, %c0_39] : memref<8x128xf32, #tpu.memory_space<vmem>>, vector<8x128xf32>
    %57 = vector.extract_strided_slice %55 {offsets = [0, 0], sizes = [8, 128], strides = [1, 1]} : vector<16x128xf32> to vector<8x128xf32>
    %58 = arith.mulf %56, %57 : vector<8x128xf32>
    %59 = vector.extract_strided_slice %43 {offsets = [0, 0], sizes = [8, 128], strides = [1, 1]} : vector<16x128xf32> to vector<8x128xf32>
    %60 = arith.addf %58, %59 : vector<8x128xf32>
    %c0_40 = arith.constant 0 : index
    %c0_41 = arith.constant 0 : index
    %61 = vector.load %arg4[%c0_40, %c0_41] : memref<8x128xf32, #tpu.memory_space<vmem>>, vector<8x128xf32>
    %62 = vector.extract_strided_slice %55 {offsets = [8, 0], sizes = [8, 128], strides = [1, 1]} : vector<16x128xf32> to vector<8x128xf32>
    %63 = arith.mulf %61, %62 : vector<8x128xf32>
    %64 = vector.extract_strided_slice %43 {offsets = [8, 0], sizes = [8, 128], strides = [1, 1]} : vector<16x128xf32> to vector<8x128xf32>
    %65 = arith.addf %63, %64 : vector<8x128xf32>
    %66 = arith.truncf %60 : vector<8x128xf32> to vector<8x128xbf16>
    %c4_42 = arith.constant 4 : index
    %c0_43 = arith.constant 0 : index
    %c0_44 = arith.constant 0 : index
    %67 = vector.load %arg6[%c4_42, %c0_43, %c0_44] : memref<7x128x128xbf16, #tpu.memory_space<vmem>>, vector<1x128x128xbf16>
    %68 = vector.shape_cast %67 : vector<1x128x128xbf16> to vector<128x128xbf16>
    %cst_45 = arith.constant dense<0.000000e+00> : vector<8x128xf32>
    %69 = tpu.matmul %66, %68, %cst_45 {dimension_numbers = #tpu.dot_dimension_numbers<[1], [0], [0], [1], [0, 0, 1, 1], [], []>} : vector<8x128xbf16>, vector<128x128xbf16>, vector<8x128xf32> -> vector<8x128xf32>
    %70 = arith.truncf %65 : vector<8x128xf32> to vector<8x128xbf16>
    %c5 = arith.constant 5 : index
    %c0_46 = arith.constant 0 : index
    %c0_47 = arith.constant 0 : index
    %71 = vector.load %arg6[%c5, %c0_46, %c0_47] : memref<7x128x128xbf16, #tpu.memory_space<vmem>>, vector<1x128x128xbf16>
    %72 = vector.shape_cast %71 : vector<1x128x128xbf16> to vector<128x128xbf16>
    %cst_48 = arith.constant dense<0.000000e+00> : vector<8x128xf32>
    %73 = tpu.matmul %70, %72, %cst_48 {dimension_numbers = #tpu.dot_dimension_numbers<[1], [0], [0], [1], [0, 0, 1, 1], [], []>} : vector<8x128xbf16>, vector<128x128xbf16>, vector<8x128xf32> -> vector<8x128xf32>
    %74 = arith.addf %69, %73 : vector<8x128xf32>
    %c5_49 = arith.constant 5 : index
    %c0_50 = arith.constant 0 : index
    %75 = vector.load %arg7[%c5_49, %c0_50] : memref<7x128xf32, #tpu.memory_space<vmem>>, vector<1x128xf32>
    %76 = vector.broadcast %75 : vector<1x128xf32> to vector<8x128xf32>
    %77 = arith.addf %74, %76 : vector<8x128xf32>
    %cst_51 = arith.constant 0.000000e+00 : f32
    %78 = vector.broadcast %cst_51 : f32 to vector<8x128xf32>
    %79 = arith.maximumf %77, %78 : vector<8x128xf32>
    %80 = arith.truncf %79 : vector<8x128xf32> to vector<8x128xbf16>
    %c6 = arith.constant 6 : index
    %c0_52 = arith.constant 0 : index
    %c0_53 = arith.constant 0 : index
    %81 = vector.load %arg6[%c6, %c0_52, %c0_53] : memref<7x128x128xbf16, #tpu.memory_space<vmem>>, vector<1x128x128xbf16>
    %82 = vector.shape_cast %81 : vector<1x128x128xbf16> to vector<128x128xbf16>
    %cst_54 = arith.constant dense<0.000000e+00> : vector<8x128xf32>
    %83 = tpu.matmul %80, %82, %cst_54 {dimension_numbers = #tpu.dot_dimension_numbers<[1], [0], [0], [1], [0, 0, 1, 1], [], []>} : vector<8x128xbf16>, vector<128x128xbf16>, vector<8x128xf32> -> vector<8x128xf32>
    %c6_55 = arith.constant 6 : index
    %c0_56 = arith.constant 0 : index
    %84 = vector.load %arg7[%c6_55, %c0_56] : memref<7x128xf32, #tpu.memory_space<vmem>>, vector<1x128xf32>
    %85 = vector.broadcast %84 : vector<1x128xf32> to vector<8x128xf32>
    %86 = arith.addf %83, %85 : vector<8x128xf32>
    %c0_57 = arith.constant 0 : index
    %c0_58 = arith.constant 0 : index
    %87 = vector.load %arg8[%c0_57, %c0_58] : memref<8x128xf32, #tpu.memory_space<vmem>>, vector<8x128xf32>
    tpu.vector_store %arg8[%c0_57, %c0_58], %86 {strides = array<i32>} : memref<8x128xf32, #tpu.memory_space<vmem>>, vector<8x128xf32>,
    return
  }
  func.func @transform_0(%arg0: i32) -> (i32, i32) {
    %c0_i32 = arith.constant 0 : i32
    %c0_i32_0 = arith.constant 0 : i32
    return %arg0, %c0_i32 : i32, i32
  }
  func.func @transform_1(%arg0: i32) -> (i32, i32) {
    %c0_i32 = arith.constant 0 : i32
    %c0_i32_0 = arith.constant 0 : i32
    return %arg0, %c0_i32 : i32, i32
  }
  func.func @transform_2(%arg0: i32) -> (i32, i32) {
    %c0_i32 = arith.constant 0 : i32
    %c0_i32_0 = arith.constant 0 : i32
    return %arg0, %c0_i32 : i32, i32
  }
  func.func @transform_3(%arg0: i32) -> (i32, i32) {
    %c0_i32 = arith.constant 0 : i32
    %c0_i32_0 = arith.constant 0 : i32
    return %arg0, %c0_i32 : i32, i32
  }
  func.func @transform_4(%arg0: i32) -> (i32, i32) {
    %c0_i32 = arith.constant 0 : i32
    %c0_i32_0 = arith.constant 0 : i32
    %c0_i32_1 = arith.constant 0 : i32
    return %c0_i32, %c0_i32_0 : i32, i32
  }
  func.func @transform_5(%arg0: i32) -> (i32, i32, i32) {
    %c0_i32 = arith.constant 0 : i32
    %c0_i32_0 = arith.constant 0 : i32
    %c0_i32_1 = arith.constant 0 : i32
    %c0_i32_2 = arith.constant 0 : i32
    return %c0_i32, %c0_i32_0, %c0_i32_1 : i32, i32, i32
  }
  func.func @transform_6(%arg0: i32) -> (i32, i32) {
    %c0_i32 = arith.constant 0 : i32
    %c0_i32_0 = arith.constant 0 : i32
    %c0_i32_1 = arith.constant 0 : i32
    return %c0_i32, %c0_i32_0 : i32, i32
  }
  func.func @transform_7(%arg0: i32) -> (i32, i32) {
    %c0_i32 = arith.constant 0 : i32
    %c0_i32_0 = arith.constant 0 : i32
    return %arg0, %c0_i32 : i32, i32
  }
}

</mosaic_0001>

<llo_original>
// kernel: regressor_forward.1
$region0: #{regressor_forward.1}
  #allocation0 [shape = 'u32[]', space=smem, size = 0x4, offset = 0x4, fixed_abs, tag = 'smem constant byte address 0x4 - core index']
  #allocation1 [shape = 'u32[144,128]{1,0:T(1,128)}', space=vmem, size = 0x12000, scoped, tag = 'internal scratch']
  #allocation2 [shape = 'f32[16,16]{1,0:T(8,128)}', space=vmem, size = 0x2000, scoped, tag = 'scratch operand']
  %s0 = inlined_call_operand.vmem [shape: f32[8,16], index: 0, kind: input, shape index: {}]
  %s1 = inlined_call_operand.vmem [shape: f32[8,16], index: 1, kind: input, shape index: {}]
  %s2 = inlined_call_operand.vmem [shape: f32[8,128], index: 2, kind: input, shape index: {}]
  %s3 = inlined_call_operand.vmem [shape: f32[8,128], index: 3, kind: input, shape index: {}]
  %s4 = inlined_call_operand.vmem [shape: bf16[16,128], index: 4, kind: input, shape index: {}]
  %s5 = inlined_call_operand.hbm [shape: bf16[7,128,128], index: 5, kind: input, shape index: {}]
  %s6 = inlined_call_operand.vmem [shape: f32[7,128], index: 6, kind: input, shape index: {}]
  %s7 = inlined_call_operand.vmem [shape: f32[8,128], index: 7, kind: output, shape index: {}]
  %s8 = sld [smem:[#allocation0]]
  $region42: #{regressor_forward.1} parent=0
    _
  %s10 = ssub.s32 1, %s8
  %s11 = scalar_select 0, %s10, %s8
  $region1: #{regressor_forward.1} parent=0
    #allocation3 [shape = 'u8[229376]{0}', space=vmem, size = 0x38000, scoped, tag = 'input window, operand 5, single buffered']
    #allocation4 [shape = 's32[1]{0}', space=sflag, size = 0x4, scoped, tag = 'scoped memory for regressor_forward.1']
    %12 = vsyncpa [#allocation4], 0
    // Predicated region
    $region2: #{regressor_forward.1} parent=1 // pred_check
      _
    $region3: #{regressor_forward.1} parent=1 // pred_check_branch
      %14 = sbr.rel (0) target = $region5
    $region4: #{regressor_forward.1} parent=1 // pred_region
      _
    $region5: #{regressor_forward.1} parent=1 // pred_fallthru
      _
    // Predicated region
    $region6: #{regressor_forward.1} parent=1 // pred_check
      _
    $region7: #{regressor_forward.1} parent=1 // pred_check_branch
      %16 = sbr.rel (0) target = $region9
    $region8: #{regressor_forward.1} parent=1 // pred_region
      _
    $region9: #{regressor_forward.1} parent=1 // pred_fallthru
      _
    // Predicated region
    $region10: #{regressor_forward.1} parent=1 // pred_check
      _
    $region11: #{regressor_forward.1} parent=1 // pred_check_branch
      %18 = sbr.rel (0) target = $region13
    $region12: #{regressor_forward.1} parent=1 // pred_region
      _
    $region13: #{regressor_forward.1} parent=1 // pred_fallthru
      _
    // Predicated region
    $region14: #{regressor_forward.1} parent=1 // pred_check
      _
    $region15: #{regressor_forward.1} parent=1 // pred_check_branch
      %20 = sbr.rel (0) target = $region17
    $region16: #{regressor_forward.1} parent=1 // pred_region
      _
    $region17: #{regressor_forward.1} parent=1 // pred_fallthru
      _
    // Predicated region
    $region18: #{regressor_forward.1} parent=1 // pred_check
      _
    $region19: #{regressor_forward.1} parent=1 // pred_check_branch
      %22 = sbr.rel (0) target = $region21
    $region20: #{regressor_forward.1} parent=1 // pred_region
      _
    $region21: #{regressor_forward.1} parent=1 // pred_fallthru
      _
    // Predicated region
    $region22: #{regressor_forward.1} parent=1 // pred_check
      _
    $region23: #{regressor_forward.1} parent=1 // pred_check_branch
      %24 = sbr.rel (0) target = $region25
    $region24: #{regressor_forward.1} parent=1 // pred_region
      %s26 = ssub.s32 7168, 7168
      %27 = vsyncadd [#allocation4], %s26
      %s28 = sshll.u32 [#allocation3], 4
      %s29 = int_to_ptr.vmem [resolvable:$true] %s28
      %34 = dma.hbm_to_vmem [thread:$0]  %s5, 7168, %s29, [#allocation4], 64, 64, 4
    $region25: #{regressor_forward.1} parent=1 // pred_fallthru
      _
    // Predicated region
    $region26: #{regressor_forward.1} parent=1 // pred_check
      _
    $region27: #{regressor_forward.1} parent=1 // pred_check_branch
      %36 = sbr.rel (0) target = $region29
    $region28: #{regressor_forward.1} parent=1 // pred_region
      _
    $region29: #{regressor_forward.1} parent=1 // pred_fallthru
      _
    // Predicated region
    $region30: #{regressor_forward.1} parent=1 // pred_check
      _
    $region31: #{regressor_forward.1} parent=1 // pred_check_branch
      %38 = sbr.rel (0) target = $region33
    $region32: #{regressor_forward.1} parent=1 // pred_region
      %39 = dma.done [#allocation4], 7168
    $region33: #{regressor_forward.1} parent=1 // pred_fallthru
      _
    %v41 = vld [vmem:[%s0] sm:$0xff]
    %vm42 = vcmask 130048
    %43 = vst.msk [vmem:[#allocation2] sm:$0xff] %vm42, %v41
    %v44 = vld [vmem:[%s1] sm:$0xff]
    %45 = vst.msk [vmem:[#allocation2 + $0x8] sm:$0xff] %vm42, %v44
    %v46 = vld [vmem:[#allocation2] sm:$0xff]
    %v47 = vld [vmem:[#allocation2 + $0x8] sm:$0xff]
    %v48 = vld [vmem:[%s4] sm:$0xf]
    %v49 = vld [vmem:[%s4 + $0x4] sm:$0xf]
    %v50 = vld [vmem:[%s6] sm:$0x1]
    %v51 = vpack.c.bf16 %v47, %v46
    %v52 = vlaneseq
    %v53 = vshrl.u32 %v52, 7
    %v54 = vsub.s32 0, %v53
    %v55 = vrot.slane %v50, %v54
    %v58 = vunpack.c.l.b16 %v48
    %v59 = vunpack.c.l.b16 %v49
    %v60 = vpack.c.b16 %v59, %v58
    %v63 = vsel %vm42, %v51, 0
    %65 = vmatprep.subr.bf16.mxu0 0
    %66 = vmatpush1.bf16.msra.mxu0 0
    %67 = vmatprep.subr.bf16.mxu0 0
    %68 = vmatpush1.bf16.msra.mxu0 0
    %69 = vmatprep.subr.bf16.mxu0 0
    %70 = vmatpush1.bf16.msra.mxu0 0
    %71 = vmatprep.subr.bf16.mxu0 0
    %72 = vmatpush1.bf16.msra.mxu0 0
    %73 = vmatprep.subr.bf16.mxu0 0
    %74 = vmatpush1.bf16.msra.mxu0 0
    %75 = vmatprep.subr.bf16.mxu0 0
    %76 = vmatpush1.bf16.msra.mxu0 0
    %77 = vmatprep.subr.bf16.mxu0 0
    %78 = vmatpush1.bf16.msra.mxu0 0
    %79 = vmatprep.subr.bf16.mxu0 0
    %80 = vmatpush1.bf16.msra.mxu0 %v60
    %81 = vmatprep.subr.bf16.mxu0 0
    %82 = vmatpush2.bf16.msra.mxu0 0
    %83 = vmatprep.subr.bf16.mxu0 0
    %84 = vmatpush2.bf16.msra.mxu0 0
    %85 = vmatprep.subr.bf16.mxu0 0
    %86 = vmatpush2.bf16.msra.mxu0 0
    %87 = vmatprep.subr.bf16.mxu0 0
    %88 = vmatpush2.bf16.msra.mxu0 0
    %89 = vmatprep.subr.bf16.mxu0 0
    %90 = vmatpush2.bf16.msra.mxu0 0
    %91 = vmatprep.subr.bf16.mxu0 0
    %92 = vmatpush2.bf16.msra.mxu0 0
    %93 = vmatprep.subr.bf16.mxu0 0
    %94 = vmatpush2.bf16.msra.mxu0 0
    %95 = vmatprep.subr.bf16.mxu0 0
    %96 = vmatpush2.bf16.msra.mxu0 0
    %97 = vmatprep.mubr.bf16.mxu0 0
    %98 = vmatmul.mubr.bf16.gmra.mxu0 %v63
    %v99 = vpop.f32.mrf.mxu0
    %v100 = vadd.f32 %v55, %v99
    %v101 = vpop.f32.mrf.mxu0
    %v102 = vpop.f32.mrf.mxu0
    %v103 = vadd.f32 %v55, %v102
    %v104 = vpop.f32.mrf.mxu0
    %105 = vdwg.mxu0
    %v106 = vmul.f32 %v100, 0.01
    %v107 = vmul.f32 %v103, 0.01
    %v108 = vmax.f32 %v100, %v106
    %v109 = vmax.f32 %v103, %v107
    %v110 = vld [vmem:[#allocation3] sm:$0xf]
    %v111 = vld [vmem:[#allocation3 + $0x4] sm:$0xf]
    %v112 = vld [vmem:[#allocation3 + $0x8] sm:$0xf]
    %v113 = vld [vmem:[#allocation3 + $0xc] sm:$0xf]
    %v114 = vld [vmem:[#allocation3 + $0x10] sm:$0xf]
    %v115 = vld [vmem:[#allocation3 + $0x14] sm:$0xf]
    %v116 = vld [vmem:[#allocation3 + $0x18] sm:$0xf]
    %v117 = vld [vmem:[#allocation3 + $0x1c] sm:$0xf]
    %v118 = vld [vmem:[#allocation3 + $0x20] sm:$0xf]
    %v119 = vld [vmem:[#allocation3 + $0x24] sm:$0xf]
    %v120 = vld [vmem:[#allocation3 + $0x28] sm:$0xf]
    %v121 = vld [vmem:[#allocation3 + $0x2c] sm:$0xf]
    %v122 = vld [vmem:[#allocation3 + $0x30] sm:$0xf]
    %v123 = vld [vmem:[#allocation3 + $0x34] sm:$0xf]
    %v124 = vld [vmem:[#allocation3 + $0x38] sm:$0xf]
    %v125 = vld [vmem:[#allocation3 + $0x3c] sm:$0xf]
    %v126 = vld [vmem:[%s6 + $0x1] sm:$0x1]
    %v127 = vpack.c.bf16 %v109, %v108
    %v128 = vlaneseq
    %v129 = vshrl.u32 %v128, 7
    %v130 = vsub.s32 0, %v129
    %v131 = vrot.slane %v126, %v130
    %v148 = vunpack.c.l.b16 %v110
    %v149 = vunpack.c.l.b16 %v111
    %v150 = vunpack.c.l.b16 %v112
    %v151 = vunpack.c.l.b16 %v113
    %v152 = vunpack.c.l.b16 %v114
    %v153 = vunpack.c.l.b16 %v115
    %v154 = vunpack.c.l.b16 %v116
    %v155 = vunpack.c.l.b16 %v117
    %v156 = vunpack.c.l.b16 %v118
    %v157 = vunpack.c.l.b16 %v119
    %v158 = vunpack.c.l.b16 %v120
    %v159 = vunpack.c.l.b16 %v121
    %v160 = vunpack.c.l.b16 %v122
    %v161 = vunpack.c.l.b16 %v123
    %v162 = vunpack.c.l.b16 %v124
    %v163 = vunpack.c.l.b16 %v125
    %v164 = vpack.c.b16 %v149, %v148
    %v165 = vpack.c.b16 %v151, %v150
    %v166 = vpack.c.b16 %v153, %v152
    %v167 = vpack.c.b16 %v155, %v154
    %v168 = vpack.c.b16 %v157, %v156
    %v169 = vpack.c.b16 %v159, %v158
    %v170 = vpack.c.b16 %v161, %v160
    %v171 = vpack.c.b16 %v163, %v162
    %180 = vmatprep.subr.bf16.mxu0 0
    %181 = vmatpush1.bf16.msra.mxu0 %v171
    %182 = vmatprep.subr.bf16.mxu0 0
    %183 = vmatpush1.bf16.msra.mxu0 %v170
    %184 = vmatprep.subr.bf16.mxu0 0
    %185 = vmatpush1.bf16.msra.mxu0 %v169
    %186 = vmatprep.subr.bf16.mxu0 0
    %187 = vmatpush1.bf16.msra.mxu0 %v168
    %188 = vmatprep.subr.bf16.mxu0 0
    %189 = vmatpush1.bf16.msra.mxu0 %v167
    %190 = vmatprep.subr.bf16.mxu0 0
    %191 = vmatpush1.bf16.msra.mxu0 %v166
    %192 = vmatprep.subr.bf16.mxu0 0
    %193 = vmatpush1.bf16.msra.mxu0 %v165
    %194 = vmatprep.subr.bf16.mxu0 0
    %195 = vmatpush1.bf16.msra.mxu0 %v164
    %196 = vmatprep.subr.bf16.mxu0 0
    %197 = vmatpush2.bf16.msra.mxu0 0
    %198 = vmatprep.subr.bf16.mxu0 0
    %199 = vmatpush2.bf16.msra.mxu0 0
    %200 = vmatprep.subr.bf16.mxu0 0
    %201 = vmatpush2.bf16.msra.mxu0 0
    %202 = vmatprep.subr.bf16.mxu0 0
    %203 = vmatpush2.bf16.msra.mxu0 0
    %204 = vmatprep.subr.bf16.mxu0 0
    %205 = vmatpush2.bf16.msra.mxu0 0
    %206 = vmatprep.subr.bf16.mxu0 0
    %207 = vmatpush2.bf16.msra.mxu0 0
    %208 = vmatprep.subr.bf16.mxu0 0
    %209 = vmatpush2.bf16.msra.mxu0 0
    %210 = vmatprep.subr.bf16.mxu0 0
    %211 = vmatpush2.bf16.msra.mxu0 0
    %212 = vmatprep.mubr.bf16.mxu0 0
    %213 = vmatmul.mubr.bf16.gmra.mxu0 %v127
    %v214 = vpop.f32.mrf.mxu0
    %v215 = vadd.f32 %v131, %v214
    %v216 = vpop.f32.mrf.mxu0
    %v217 = vpop.f32.mrf.mxu0
    %v218 = vadd.f32 %v131, %v217
    %v219 = vpop.f32.mrf.mxu0
    %220 = vdwg.mxu0
    %v221 = vmul.f32 %v215, 0.01
    %v222 = vmul.f32 %v218, 0.01
    %v223 = vmax.f32 %v215, %v221
    %v224 = vmax.f32 %v218, %v222
    %s225 = scalar_lea.vmem [#allocation3], 64
    %v226 = vld [vmem:[%s225] sm:$0xf]
    %v227 = vld [vmem:[%s225 + $0x4] sm:$0xf]
    %v228 = vld [vmem:[%s225 + $0x8] sm:$0xf]
    %v229 = vld [vmem:[%s225 + $0xc] sm:$0xf]
    %v230 = vld [vmem:[%s225 + $0x10] sm:$0xf]
    %v231 = vld [vmem:[%s225 + $0x14] sm:$0xf]
    %v232 = vld [vmem:[%s225 + $0x18] sm:$0xf]
    %v233 = vld [vmem:[%s225 + $0x1c] sm:$0xf]
    %v234 = vld [vmem:[%s225 + $0x20] sm:$0xf]
    %v235 = vld [vmem:[%s225 + $0x24] sm:$0xf]
    %v236 = vld [vmem:[%s225 + $0x28] sm:$0xf]
    %v237 = vld [vmem:[%s225 + $0x2c] sm:$0xf]
    %v238 = vld [vmem:[%s225 + $0x30] sm:$0xf]
    %v239 = vld [vmem:[%s225 + $0x34] sm:$0xf]
    %v240 = vld [vmem:[%s225 + $0x38] sm:$0xf]
    %v241 = vld [vmem:[%s225 + $0x3c] sm:$0xf]
    %v242 = vld [vmem:[%s6 + $0x2] sm:$0x1]
    %v243 = vpack.c.bf16 %v224, %v223
    %v244 = vlaneseq
    %v245 = vshrl.u32 %v244, 7
    %v246 = vsub.s32 0, %v245
    %v247 = vrot.slane %v242, %v246
    %v264 = vunpack.c.l.b16 %v226
    %v265 = vunpack.c.l.b16 %v227
    %v266 = vunpack.c.l.b16 %v228
    %v267 = vunpack.c.l.b16 %v229
    %v268 = vunpack.c.l.b16 %v230
    %v269 = vunpack.c.l.b16 %v231
    %v270 = vunpack.c.l.b16 %v232
    %v271 = vunpack.c.l.b16 %v233
    %v272 = vunpack.c.l.b16 %v234
    %v273 = vunpack.c.l.b16 %v235
    %v274 = vunpack.c.l.b16 %v236
    %v275 = vunpack.c.l.b16 %v237
    %v276 = vunpack.c.l.b16 %v238
    %v277 = vunpack.c.l.b16 %v239
    %v278 = vunpack.c.l.b16 %v240
    %v279 = vunpack.c.l.b16 %v241
    %v280 = vpack.c.b16 %v265, %v264
    %v281 = vpack.c.b16 %v267, %v266
    %v282 = vpack.c.b16 %v269, %v268
    %v283 = vpack.c.b16 %v271, %v270
    %v284 = vpack.c.b16 %v273, %v272
    %v285 = vpack.c.b16 %v275, %v274
    %v286 = vpack.c.b16 %v277, %v276
    %v287 = vpack.c.b16 %v279, %v278
    %296 = vmatprep.subr.bf16.mxu0 0
    %297 = vmatpush1.bf16.msra.mxu0 %v287
    %298 = vmatprep.subr.bf16.mxu0 0
    %299 = vmatpush1.bf16.msra.mxu0 %v286
    %300 = vmatprep.subr.bf16.mxu0 0
    %301 = vmatpush1.bf16.msra.mxu0 %v285
    %302 = vmatprep.subr.bf16.mxu0 0
    %303 = vmatpush1.bf16.msra.mxu0 %v284
    %304 = vmatprep.subr.bf16.mxu0 0
    %305 = vmatpush1.bf16.msra.mxu0 %v283
    %306 = vmatprep.subr.bf16.mxu0 0
    %307 = vmatpush1.bf16.msra.mxu0 %v282
    %308 = vmatprep.subr.bf16.mxu0 0
    %309 = vmatpush1.bf16.msra.mxu0 %v281
    %310 = vmatprep.subr.bf16.mxu0 0
    %311 = vmatpush1.bf16.msra.mxu0 %v280
    %312 = vmatprep.subr.bf16.mxu0 0
    %313 = vmatpush2.bf16.msra.mxu0 0
    %314 = vmatprep.subr.bf16.mxu0 0
    %315 = vmatpush2.bf16.msra.mxu0 0
    %316 = vmatprep.subr.bf16.mxu0 0
    %317 = vmatpush2.bf16.msra.mxu0 0
    %318 = vmatprep.subr.bf16.mxu0 0
    %319 = vmatpush2.bf16.msra.mxu0 0
    %320 = vmatprep.subr.bf16.mxu0 0
    %321 = vmatpush2.bf16.msra.mxu0 0
    %322 = vmatprep.subr.bf16.mxu0 0
    %323 = vmatpush2.bf16.msra.mxu0 0
    %324 = vmatprep.subr.bf16.mxu0 0
    %325 = vmatpush2.bf16.msra.mxu0 0
    %326 = vmatprep.subr.bf16.mxu0 0
    %327 = vmatpush2.bf16.msra.mxu0 0
    %328 = vmatprep.mubr.bf16.mxu0 0
    %329 = vmatmul.mubr.bf16.gmra.mxu0 %v243
    %v330 = vpop.f32.mrf.mxu0
    %v331 = vadd.f32 %v247, %v330
    %v332 = vpop.f32.mrf.mxu0
    %v333 = vpop.f32.mrf.mxu0
    %v334 = vadd.f32 %v247, %v333
    %v335 = vpop.f32.mrf.mxu0
    %336 = vdwg.mxu0
    %v337 = vmul.f32 %v331, 0.01
    %v338 = vmul.f32 %v334, 0.01
    %v339 = vmax.f32 %v331, %v337
    %v340 = vmax.f32 %v334, %v338
    %s341 = scalar_lea.vmem [#allocation3], 128
    %v342 = vld [vmem:[%s341] sm:$0xf]
    %v343 = vld [vmem:[%s341 + $0x4] sm:$0xf]
    %v344 = vld [vmem:[%s341 + $0x8] sm:$0xf]
    %v345 = vld [vmem:[%s341 + $0xc] sm:$0xf]
    %v346 = vld [vmem:[%s341 + $0x10] sm:$0xf]
    %v347 = vld [vmem:[%s341 + $0x14] sm:$0xf]
    %v348 = vld [vmem:[%s341 + $0x18] sm:$0xf]
    %v349 = vld [vmem:[%s341 + $0x1c] sm:$0xf]
    %v350 = vld [vmem:[%s341 + $0x20] sm:$0xf]
    %v351 = vld [vmem:[%s341 + $0x24] sm:$0xf]
    %v352 = vld [vmem:[%s341 + $0x28] sm:$0xf]
    %v353 = vld [vmem:[%s341 + $0x2c] sm:$0xf]
    %v354 = vld [vmem:[%s341 + $0x30] sm:$0xf]
    %v355 = vld [vmem:[%s341 + $0x34] sm:$0xf]
    %v356 = vld [vmem:[%s341 + $0x38] sm:$0xf]
    %v357 = vld [vmem:[%s341 + $0x3c] sm:$0xf]
    %v358 = vld [vmem:[%s6 + $0x3] sm:$0x1]
    %v359 = vpack.c.bf16 %v340, %v339
    %v360 = vlaneseq
    %v361 = vshrl.u32 %v360, 7
    %v362 = vsub.s32 0, %v361
    %v363 = vrot.slane %v358, %v362
    %v380 = vunpack.c.l.b16 %v342
    %v381 = vunpack.c.l.b16 %v343
    %v382 = vunpack.c.l.b16 %v344
    %v383 = vunpack.c.l.b16 %v345
    %v384 = vunpack.c.l.b16 %v346
    %v385 = vunpack.c.l.b16 %v347
    %v386 = vunpack.c.l.b16 %v348
    %v387 = vunpack.c.l.b16 %v349
    %v388 = vunpack.c.l.b16 %v350
    %v389 = vunpack.c.l.b16 %v351
    %v390 = vunpack.c.l.b16 %v352
    %v391 = vunpack.c.l.b16 %v353
    %v392 = vunpack.c.l.b16 %v354
    %v393 = vunpack.c.l.b16 %v355
    %v394 = vunpack.c.l.b16 %v356
    %v395 = vunpack.c.l.b16 %v357
    %v396 = vpack.c.b16 %v381, %v380
    %v397 = vpack.c.b16 %v383, %v382
    %v398 = vpack.c.b16 %v385, %v384
    %v399 = vpack.c.b16 %v387, %v386
    %v400 = vpack.c.b16 %v389, %v388
    %v401 = vpack.c.b16 %v391, %v390
    %v402 = vpack.c.b16 %v393, %v392
    %v403 = vpack.c.b16 %v395, %v394
    %412 = vmatprep.subr.bf16.mxu0 0
    %413 = vmatpush1.bf16.msra.mxu0 %v403
    %414 = vmatprep.subr.bf16.mxu0 0
    %415 = vmatpush1.bf16.msra.mxu0 %v402
    %416 = vmatprep.subr.bf16.mxu0 0
    %417 = vmatpush1.bf16.msra.mxu0 %v401
    %418 = vmatprep.subr.bf16.mxu0 0
    %419 = vmatpush1.bf16.msra.mxu0 %v400
    %420 = vmatprep.subr.bf16.mxu0 0
    %421 = vmatpush1.bf16.msra.mxu0 %v399
    %422 = vmatprep.subr.bf16.mxu0 0
    %423 = vmatpush1.bf16.msra.mxu0 %v398
    %424 = vmatprep.subr.bf16.mxu0 0
    %425 = vmatpush1.bf16.msra.mxu0 %v397
    %426 = vmatprep.subr.bf16.mxu0 0
    %427 = vmatpush1.bf16.msra.mxu0 %v396
    %428 = vmatprep.subr.bf16.mxu0 0
    %429 = vmatpush2.bf16.msra.mxu0 0
    %430 = vmatprep.subr.bf16.mxu0 0
    %431 = vmatpush2.bf16.msra.mxu0 0
    %432 = vmatprep.subr.bf16.mxu0 0
    %433 = vmatpush2.bf16.msra.mxu0 0
    %434 = vmatprep.subr.bf16.mxu0 0
    %435 = vmatpush2.bf16.msra.mxu0 0
    %436 = vmatprep.subr.bf16.mxu0 0
    %437 = vmatpush2.bf16.msra.mxu0 0
    %438 = vmatprep.subr.bf16.mxu0 0
    %439 = vmatpush2.bf16.msra.mxu0 0
    %440 = vmatprep.subr.bf16.mxu0 0
    %441 = vmatpush2.bf16.msra.mxu0 0
    %442 = vmatprep.subr.bf16.mxu0 0
    %443 = vmatpush2.bf16.msra.mxu0 0
    %444 = vmatprep.mubr.bf16.mxu0 0
    %445 = vmatmul.mubr.bf16.gmra.mxu0 %v359
    %v446 = vpop.f32.mrf.mxu0
    %v447 = vadd.f32 %v363, %v446
    %v448 = vpop.f32.mrf.mxu0
    %v449 = vpop.f32.mrf.mxu0
    %v450 = vadd.f32 %v363, %v449
    %v451 = vpop.f32.mrf.mxu0
    %452 = vdwg.mxu0
    %v453 = vmul.f32 %v447, 0.01
    %v454 = vmul.f32 %v450, 0.01
    %v455 = vmax.f32 %v447, %v453
    %v456 = vmax.f32 %v450, %v454
    %s457 = scalar_lea.vmem [#allocation3], 192
    %v458 = vld [vmem:[%s457] sm:$0xf]
    %v459 = vld [vmem:[%s457 + $0x4] sm:$0xf]
    %v460 = vld [vmem:[%s457 + $0x8] sm:$0xf]
    %v461 = vld [vmem:[%s457 + $0xc] sm:$0xf]
    %v462 = vld [vmem:[%s457 + $0x10] sm:$0xf]
    %v463 = vld [vmem:[%s457 + $0x14] sm:$0xf]
    %v464 = vld [vmem:[%s457 + $0x18] sm:$0xf]
    %v465 = vld [vmem:[%s457 + $0x1c] sm:$0xf]
    %v466 = vld [vmem:[%s457 + $0x20] sm:$0xf]
    %v467 = vld [vmem:[%s457 + $0x24] sm:$0xf]
    %v468 = vld [vmem:[%s457 + $0x28] sm:$0xf]
    %v469 = vld [vmem:[%s457 + $0x2c] sm:$0xf]
    %v470 = vld [vmem:[%s457 + $0x30] sm:$0xf]
    %v471 = vld [vmem:[%s457 + $0x34] sm:$0xf]
    %v472 = vld [vmem:[%s457 + $0x38] sm:$0xf]
    %v473 = vld [vmem:[%s457 + $0x3c] sm:$0xf]
    %v474 = vld [vmem:[%s6 + $0x4] sm:$0x1]
    %v475 = vpack.c.bf16 %v456, %v455
    %v476 = vlaneseq
    %v477 = vshrl.u32 %v476, 7
    %v478 = vsub.s32 0, %v477
    %v479 = vrot.slane %v474, %v478
    %v496 = vunpack.c.l.b16 %v458
    %v497 = vunpack.c.l.b16 %v459
    %v498 = vunpack.c.l.b16 %v460
    %v499 = vunpack.c.l.b16 %v461
    %v500 = vunpack.c.l.b16 %v462
    %v501 = vunpack.c.l.b16 %v463
    %v502 = vunpack.c.l.b16 %v464
    %v503 = vunpack.c.l.b16 %v465
    %v504 = vunpack.c.l.b16 %v466
    %v505 = vunpack.c.l.b16 %v467
    %v506 = vunpack.c.l.b16 %v468
    %v507 = vunpack.c.l.b16 %v469
    %v508 = vunpack.c.l.b16 %v470
    %v509 = vunpack.c.l.b16 %v471
    %v510 = vunpack.c.l.b16 %v472
    %v511 = vunpack.c.l.b16 %v473
    %v512 = vpack.c.b16 %v497, %v496
    %v513 = vpack.c.b16 %v499, %v498
    %v514 = vpack.c.b16 %v501, %v500
    %v515 = vpack.c.b16 %v503, %v502
    %v516 = vpack.c.b16 %v505, %v504
    %v517 = vpack.c.b16 %v507, %v506
    %v518 = vpack.c.b16 %v509, %v508
    %v519 = vpack.c.b16 %v511, %v510
    %528 = vmatprep.subr.bf16.mxu0 0
    %529 = vmatpush1.bf16.msra.mxu0 %v519
    %530 = vmatprep.subr.bf16.mxu0 0
    %531 = vmatpush1.bf16.msra.mxu0 %v518
    %532 = vmatprep.subr.bf16.mxu0 0
    %533 = vmatpush1.bf16.msra.mxu0 %v517
    %534 = vmatprep.subr.bf16.mxu0 0
    %535 = vmatpush1.bf16.msra.mxu0 %v516
    %536 = vmatprep.subr.bf16.mxu0 0
    %537 = vmatpush1.bf16.msra.mxu0 %v515
    %538 = vmatprep.subr.bf16.mxu0 0
    %539 = vmatpush1.bf16.msra.mxu0 %v514
    %540 = vmatprep.subr.bf16.mxu0 0
    %541 = vmatpush1.bf16.msra.mxu0 %v513
    %542 = vmatprep.subr.bf16.mxu0 0
    %543 = vmatpush1.bf16.msra.mxu0 %v512
    %544 = vmatprep.subr.bf16.mxu0 0
    %545 = vmatpush2.bf16.msra.mxu0 0
    %546 = vmatprep.subr.bf16.mxu0 0
    %547 = vmatpush2.bf16.msra.mxu0 0
    %548 = vmatprep.subr.bf16.mxu0 0
    %549 = vmatpush2.bf16.msra.mxu0 0
    %550 = vmatprep.subr.bf16.mxu0 0
    %551 = vmatpush2.bf16.msra.mxu0 0
    %552 = vmatprep.subr.bf16.mxu0 0
    %553 = vmatpush2.bf16.msra.mxu0 0
    %554 = vmatprep.subr.bf16.mxu0 0
    %555 = vmatpush2.bf16.msra.mxu0 0
    %556 = vmatprep.subr.bf16.mxu0 0
    %557 = vmatpush2.bf16.msra.mxu0 0
    %558 = vmatprep.subr.bf16.mxu0 0
    %559 = vmatpush2.bf16.msra.mxu0 0
    %560 = vmatprep.mubr.bf16.mxu0 0
    %561 = vmatmul.mubr.bf16.gmra.mxu0 %v475
    %v562 = vpop.f32.mrf.mxu0
    %v563 = vadd.f32 %v479, %v562
    %v564 = vpop.f32.mrf.mxu0
    %v565 = vpop.f32.mrf.mxu0
    %v566 = vadd.f32 %v479, %v565
    %v567 = vpop.f32.mrf.mxu0
    %568 = vdwg.mxu0
    %v569 = vmul.f32 %v563, 0.5
    %v570 = vmul.f32 %v566, 0.5
    %v571 = vadd.f32 %v569, -6.9077554
    %v572 = vadd.f32 %v570, -6.9077554
    %v573 = vmul.f32 %v571, 1.442695
    %v574 = vpow.pop %v573
    %v575 = vmul.f32 %v572, 1.442695
    %v576 = vpow.pop %v575
    %v577 = vld [vmem:[%s2] sm:$0xff]
    %v578 = vmul.f32 %v577, %v574
    %v579 = vadd.f32 %v578, %v455
    %v580 = vld [vmem:[%s3] sm:$0xff]
    %v581 = vmul.f32 %v580, %v576
    %v582 = vadd.f32 %v581, %v456
    %v583 = vpack.c.bf16 %v579, %v579
    %s584 = scalar_lea.vmem [#allocation3], 256
    %v585 = vld [vmem:[%s584] sm:$0xf]
    %v586 = vld [vmem:[%s584 + $0x4] sm:$0xf]
    %v587 = vld [vmem:[%s584 + $0x8] sm:$0xf]
    %v588 = vld [vmem:[%s584 + $0xc] sm:$0xf]
    %v589 = vld [vmem:[%s584 + $0x10] sm:$0xf]
    %v590 = vld [vmem:[%s584 + $0x14] sm:$0xf]
    %v591 = vld [vmem:[%s584 + $0x18] sm:$0xf]
    %v592 = vld [vmem:[%s584 + $0x1c] sm:$0xf]
    %v593 = vld [vmem:[%s584 + $0x20] sm:$0xf]
    %v594 = vld [vmem:[%s584 + $0x24] sm:$0xf]
    %v595 = vld [vmem:[%s584 + $0x28] sm:$0xf]
    %v596 = vld [vmem:[%s584 + $0x2c] sm:$0xf]
    %v597 = vld [vmem:[%s584 + $0x30] sm:$0xf]
    %v598 = vld [vmem:[%s584 + $0x34] sm:$0xf]
    %v599 = vld [vmem:[%s584 + $0x38] sm:$0xf]
    %v600 = vld [vmem:[%s584 + $0x3c] sm:$0xf]
    %v601 = vpack.c.bf16 %v582, %v582
    %s602 = scalar_lea.vmem [#allocation3], 320
    %v603 = vld [vmem:[%s602] sm:$0xf]
    %v604 = vld [vmem:[%s602 + $0x4] sm:$0xf]
    %v605 = vld [vmem:[%s602 + $0x8] sm:$0xf]
    %v606 = vld [vmem:[%s602 + $0xc] sm:$0xf]
    %v607 = vld [vmem:[%s602 + $0x10] sm:$0xf]
    %v608 = vld [vmem:[%s602 + $0x14] sm:$0xf]
    %v609 = vld [vmem:[%s602 + $0x18] sm:$0xf]
    %v610 = vld [vmem:[%s602 + $0x1c] sm:$0xf]
    %v611 = vld [vmem:[%s602 + $0x20] sm:$0xf]
    %v612 = vld [vmem:[%s602 + $0x24] sm:$0xf]
    %v613 = vld [vmem:[%s602 + $0x28] sm:$0xf]
    %v614 = vld [vmem:[%s602 + $0x2c] sm:$0xf]
    %v615 = vld [vmem:[%s602 + $0x30] sm:$0xf]
    %v616 = vld [vmem:[%s602 + $0x34] sm:$0xf]
    %v617 = vld [vmem:[%s602 + $0x38] sm:$0xf]
    %v618 = vld [vmem:[%s602 + $0x3c] sm:$0xf]
    %v635 = vunpack.c.l.b16 %v603
    %v636 = vunpack.c.l.b16 %v604
    %v637 = vunpack.c.l.b16 %v605
    %v638 = vunpack.c.l.b16 %v606
    %v639 = vunpack.c.l.b16 %v607
    %v640 = vunpack.c.l.b16 %v608
    %v641 = vunpack.c.l.b16 %v609
    %v642 = vunpack.c.l.b16 %v610
    %v643 = vunpack.c.l.b16 %v611
    %v644 = vunpack.c.l.b16 %v612
    %v645 = vunpack.c.l.b16 %v613
    %v646 = vunpack.c.l.b16 %v614
    %v647 = vunpack.c.l.b16 %v615
    %v648 = vunpack.c.l.b16 %v616
    %v649 = vunpack.c.l.b16 %v617
    %v650 = vunpack.c.l.b16 %v618
    %v651 = vpack.c.b16 %v636, %v635
    %v652 = vpack.c.b16 %v638, %v637
    %v653 = vpack.c.b16 %v640, %v639
    %v654 = vpack.c.b16 %v642, %v641
    %v655 = vpack.c.b16 %v644, %v643
    %v656 = vpack.c.b16 %v646, %v645
    %v657 = vpack.c.b16 %v648, %v647
    %v658 = vpack.c.b16 %v650, %v649
    %667 = vmatprep.subr.bf16.mxu0 0
    %668 = vmatpush1.bf16.msra.mxu0 %v658
    %669 = vmatprep.subr.bf16.mxu0 0
    %670 = vmatpush1.bf16.msra.mxu0 %v657
    %671 = vmatprep.subr.bf16.mxu0 0
    %672 = vmatpush1.bf16.msra.mxu0 %v656
    %673 = vmatprep.subr.bf16.mxu0 0
    %674 = vmatpush1.bf16.msra.mxu0 %v655
    %675 = vmatprep.subr.bf16.mxu0 0
    %676 = vmatpush1.bf16.msra.mxu0 %v654
    %677 = vmatprep.subr.bf16.mxu0 0
    %678 = vmatpush1.bf16.msra.mxu0 %v653
    %679 = vmatprep.subr.bf16.mxu0 0
    %680 = vmatpush1.bf16.msra.mxu0 %v652
    %681 = vmatprep.subr.bf16.mxu0 0
    %682 = vmatpush1.bf16.msra.mxu0 %v651
    %683 = vmatprep.subr.bf16.mxu0 0
    %684 = vmatpush2.bf16.msra.mxu0 0
    %685 = vmatprep.subr.bf16.mxu0 0
    %686 = vmatpush2.bf16.msra.mxu0 0
    %687 = vmatprep.subr.bf16.mxu0 0
    %688 = vmatpush2.bf16.msra.mxu0 0
    %689 = vmatprep.subr.bf16.mxu0 0
    %690 = vmatpush2.bf16.msra.mxu0 0
    %691 = vmatprep.subr.bf16.mxu0 0
    %692 = vmatpush2.bf16.msra.mxu0 0
    %693 = vmatprep.subr.bf16.mxu0 0
    %694 = vmatpush2.bf16.msra.mxu0 0
    %695 = vmatprep.subr.bf16.mxu0 0
    %696 = vmatpush2.bf16.msra.mxu0 0
    %697 = vmatprep.subr.bf16.mxu0 0
    %698 = vmatpush2.bf16.msra.mxu0 0
    %699 = vmatprep.mubr.bf16.mxu0 0
    %700 = vmatmul.mubr.bf16.gmra.mxu0 %v601
    %v701 = vpop.f32.mrf.mxu0
    %v702 = vadd.f32 0.0, %v701
    %v703 = vpop.f32.mrf.mxu0
    %v704 = vpop.f32.mrf.mxu0
    %v705 = vpop.f32.mrf.mxu0
    %706 = vdwg.mxu0
    %v723 = vunpack.c.l.b16 %v585
    %v724 = vunpack.c.l.b16 %v586
    %v725 = vunpack.c.l.b16 %v587
    %v726 = vunpack.c.l.b16 %v588
    %v727 = vunpack.c.l.b16 %v589
    %v728 = vunpack.c.l.b16 %v590
    %v729 = vunpack.c.l.b16 %v591
    %v730 = vunpack.c.l.b16 %v592
    %v731 = vunpack.c.l.b16 %v593
    %v732 = vunpack.c.l.b16 %v594
    %v733 = vunpack.c.l.b16 %v595
    %v734 = vunpack.c.l.b16 %v596
    %v735 = vunpack.c.l.b16 %v597
    %v736 = vunpack.c.l.b16 %v598
    %v737 = vunpack.c.l.b16 %v599
    %v738 = vunpack.c.l.b16 %v600
    %v739 = vpack.c.b16 %v724, %v723
    %v740 = vpack.c.b16 %v726, %v725
    %v741 = vpack.c.b16 %v728, %v727
    %v742 = vpack.c.b16 %v730, %v729
    %v743 = vpack.c.b16 %v732, %v731
    %v744 = vpack.c.b16 %v734, %v733
    %v745 = vpack.c.b16 %v736, %v735
    %v746 = vpack.c.b16 %v738, %v737
    %755 = vmatprep.subr.bf16.mxu0 0
    %756 = vmatpush1.bf16.msra.mxu0 %v746
    %757 = vmatprep.subr.bf16.mxu0 0
    %758 = vmatpush1.bf16.msra.mxu0 %v745
    %759 = vmatprep.subr.bf16.mxu0 0
    %760 = vmatpush1.bf16.msra.mxu0 %v744
    %761 = vmatprep.subr.bf16.mxu0 0
    %762 = vmatpush1.bf16.msra.mxu0 %v743
    %763 = vmatprep.subr.bf16.mxu0 0
    %764 = vmatpush1.bf16.msra.mxu0 %v742
    %765 = vmatprep.subr.bf16.mxu0 0
    %766 = vmatpush1.bf16.msra.mxu0 %v741
    %767 = vmatprep.subr.bf16.mxu0 0
    %768 = vmatpush1.bf16.msra.mxu0 %v740
    %769 = vmatprep.subr.bf16.mxu0 0
    %770 = vmatpush1.bf16.msra.mxu0 %v739
    %771 = vmatprep.subr.bf16.mxu0 0
    %772 = vmatpush2.bf16.msra.mxu0 0
    %773 = vmatprep.subr.bf16.mxu0 0
    %774 = vmatpush2.bf16.msra.mxu0 0
    %775 = vmatprep.subr.bf16.mxu0 0
    %776 = vmatpush2.bf16.msra.mxu0 0
    %777 = vmatprep.subr.bf16.mxu0 0
    %778 = vmatpush2.bf16.msra.mxu0 0
    %779 = vmatprep.subr.bf16.mxu0 0
    %780 = vmatpush2.bf16.msra.mxu0 0
    %781 = vmatprep.subr.bf16.mxu0 0
    %782 = vmatpush2.bf16.msra.mxu0 0
    %783 = vmatprep.subr.bf16.mxu0 0
    %784 = vmatpush2.bf16.msra.mxu0 0
    %785 = vmatprep.subr.bf16.mxu0 0
    %786 = vmatpush2.bf16.msra.mxu0 0
    %787 = vmatprep.mubr.bf16.mxu0 0
    %788 = vmatmul.mubr.bf16.gmra.mxu0 %v583
    %v789 = vpop.f32.mrf.mxu0
    %v790 = vadd.f32 %v702, %v789
    %v791 = vpop.f32.mrf.mxu0
    %v792 = vpop.f32.mrf.mxu0
    %v793 = vpop.f32.mrf.mxu0
    %794 = vdwg.mxu0
    %v795 = vld [vmem:[%s6 + $0x5] sm:$0x1]
    %v796 = vlaneseq
    %v797 = vshrl.u32 %v796, 7
    %v798 = vsub.s32 0, %v797
    %v799 = vrot.slane %v795, %v798
    %v800 = vadd.f32 %v790, %v799
    %v801 = vmax.f32 %v800, 0.0
    %v802 = vpack.c.bf16 %v801, %v801
    %s803 = scalar_lea.vmem [#allocation3], 384
    %v804 = vld [vmem:[%s803] sm:$0xf]
    %v805 = vld [vmem:[%s803 + $0x4] sm:$0xf]
    %v806 = vld [vmem:[%s803 + $0x8] sm:$0xf]
    %v807 = vld [vmem:[%s803 + $0xc] sm:$0xf]
    %v808 = vld [vmem:[%s803 + $0x10] sm:$0xf]
    %v809 = vld [vmem:[%s803 + $0x14] sm:$0xf]
    %v810 = vld [vmem:[%s803 + $0x18] sm:$0xf]
    %v811 = vld [vmem:[%s803 + $0x1c] sm:$0xf]
    %v812 = vld [vmem:[%s803 + $0x20] sm:$0xf]
    %v813 = vld [vmem:[%s803 + $0x24] sm:$0xf]
    %v814 = vld [vmem:[%s803 + $0x28] sm:$0xf]
    %v815 = vld [vmem:[%s803 + $0x2c] sm:$0xf]
    %v816 = vld [vmem:[%s803 + $0x30] sm:$0xf]
    %v817 = vld [vmem:[%s803 + $0x34] sm:$0xf]
    %v818 = vld [vmem:[%s803 + $0x38] sm:$0xf]
    %v819 = vld [vmem:[%s803 + $0x3c] sm:$0xf]
    %v820 = vld [vmem:[%s6 + $0x6] sm:$0x1]
    %v821 = vlaneseq
    %v822 = vshrl.u32 %v821, 7
    %v823 = vsub.s32 0, %v822
    %v824 = vrot.slane %v820, %v823
    %v841 = vunpack.c.l.b16 %v804
    %v842 = vunpack.c.l.b16 %v805
    %v843 = vunpack.c.l.b16 %v806
    %v844 = vunpack.c.l.b16 %v807
    %v845 = vunpack.c.l.b16 %v808
    %v846 = vunpack.c.l.b16 %v809
    %v847 = vunpack.c.l.b16 %v810
    %v848 = vunpack.c.l.b16 %v811
    %v849 = vunpack.c.l.b16 %v812
    %v850 = vunpack.c.l.b16 %v813
    %v851 = vunpack.c.l.b16 %v814
    %v852 = vunpack.c.l.b16 %v815
    %v853 = vunpack.c.l.b16 %v816
    %v854 = vunpack.c.l.b16 %v817
    %v855 = vunpack.c.l.b16 %v818
    %v856 = vunpack.c.l.b16 %v819
    %v857 = vpack.c.b16 %v842, %v841
    %v858 = vpack.c.b16 %v844, %v843
    %v859 = vpack.c.b16 %v846, %v845
    %v860 = vpack.c.b16 %v848, %v847
    %v861 = vpack.c.b16 %v850, %v849
    %v862 = vpack.c.b16 %v852, %v851
    %v863 = vpack.c.b16 %v854, %v853
    %v864 = vpack.c.b16 %v856, %v855
    %873 = vmatprep.subr.bf16.mxu0 0
    %874 = vmatpush1.bf16.msra.mxu0 %v864
    %875 = vmatprep.subr.bf16.mxu0 0
    %876 = vmatpush1.bf16.msra.mxu0 %v863
    %877 = vmatprep.subr.bf16.mxu0 0
    %878 = vmatpush1.bf16.msra.mxu0 %v862
    %879 = vmatprep.subr.bf16.mxu0 0
    %880 = vmatpush1.bf16.msra.mxu0 %v861
    %881 = vmatprep.subr.bf16.mxu0 0
    %882 = vmatpush1.bf16.msra.mxu0 %v860
    %883 = vmatprep.subr.bf16.mxu0 0
    %884 = vmatpush1.bf16.msra.mxu0 %v859
    %885 = vmatprep.subr.bf16.mxu0 0
    %886 = vmatpush1.bf16.msra.mxu0 %v858
    %887 = vmatprep.subr.bf16.mxu0 0
    %888 = vmatpush1.bf16.msra.mxu0 %v857
    %889 = vmatprep.subr.bf16.mxu0 0
    %890 = vmatpush2.bf16.msra.mxu0 0
    %891 = vmatprep.subr.bf16.mxu0 0
    %892 = vmatpush2.bf16.msra.mxu0 0
    %893 = vmatprep.subr.bf16.mxu0 0
    %894 = vmatpush2.bf16.msra.mxu0 0
    %895 = vmatprep.subr.bf16.mxu0 0
    %896 = vmatpush2.bf16.msra.mxu0 0
    %897 = vmatprep.subr.bf16.mxu0 0
    %898 = vmatpush2.bf16.msra.mxu0 0
    %899 = vmatprep.subr.bf16.mxu0 0
    %900 = vmatpush2.bf16.msra.mxu0 0
    %901 = vmatprep.subr.bf16.mxu0 0
    %902 = vmatpush2.bf16.msra.mxu0 0
    %903 = vmatprep.subr.bf16.mxu0 0
    %904 = vmatpush2.bf16.msra.mxu0 0
    %905 = vmatprep.mubr.bf16.mxu0 0
    %906 = vmatmul.mubr.bf16.gmra.mxu0 %v802
    %v907 = vpop.f32.mrf.mxu0
    %v908 = vadd.f32 %v824, %v907
    %v909 = vpop.f32.mrf.mxu0
    %v910 = vpop.f32.mrf.mxu0
    %v911 = vpop.f32.mrf.mxu0
    %912 = vdwg.mxu0
    %913 = vst [vmem:[%s7] sm:$0xff] %v908
    // Predicated region
    $region34: #{regressor_forward.1} parent=1 // pred_check
      _
    $region35: #{regressor_forward.1} parent=1 // pred_check_branch
      %915 = sbr.rel (0) target = $region37
    $region36: #{regressor_forward.1} parent=1 // pred_region
      _
    $region37: #{regressor_forward.1} parent=1 // pred_fallthru
      _
    // Predicated region
    $region38: #{regressor_forward.1} parent=1 // pred_check
      _
    $region39: #{regressor_forward.1} parent=1 // pred_check_branch
      %917 = sbr.rel (0) target = $region41
    $region40: #{regressor_forward.1} parent=1 // pred_region
      _
    $region41: #{regressor_forward.1} parent=1 // pred_fallthru
      _
    %918 = vsyncpa [#allocation4], 1

</llo_original>
